<compile_context>
chip_gen: v7x
topology: tpu7x:2x2x1
jax: 0.10.0
libtpu: 0.0.40
codegen_flags: <defaults>
</compile_context>

<pallas_src>
import numpy as np
import jax
import jax.numpy as jnp
from jax import lax
from jax.experimental import pallas as pl
from jax.experimental.pallas import tpu as pltpu

NUM_CLASSES = 9            # -> K = 8 ordinal-threshold classes
LANES = 128                # TPU lane width
SUBLANES = 8               # f32 sublanes per vreg
ROW_ALIGN = 32             # tile_rows granularity (safe for f32 / bf16 / int8 blocks)
MAX_TILE_ROWS = 4096       # 2 MiB f32 per input block per buffer
MIN_GRID_BLOCKS = 4        # keep >= ~4 grid steps so both v7x TensorCores stream
FASTPATH_ROWS = 64         # below ~8K elements, plain XLA beats the kernel launch


def _round_up(x: int, m: int) -> int:
    return ((x + m - 1) // m) * m


def _reference_loss(logits: jax.Array, labels: jax.Array, weights: jax.Array) -> jax.Array:
    """Pure-jnp forward (also used as the tiny-batch fast path)."""
    x = logits.astype(jnp.float32)
    y = labels.astype(jnp.float32)
    bce = -(y * jnp.maximum(jnp.log(x), -100.0)
            + (1.0 - y) * jnp.maximum(jnp.log(1.0 - x), -100.0))
    return jnp.mean(bce * weights.astype(jnp.float32)[None, :])


def _make_kernel(tile_rows: int, valid_last_rows: int, ragged: bool):
    def kernel(x_ref, y_ref, w_ref, out_ref):
        # x/y: (tile_rows, 128) probabilities / targets; w: (1, 128) = weights[lane%K]/(B*K)
        x = x_ref[...].astype(jnp.float32)
        y = y_ref[...].astype(jnp.float32)

        # PyTorch binary_cross_entropy clamps the log terms at -100 (this also makes
        # the padded x=1, y=1 elements contribute exactly zero).
        log_x = jnp.maximum(jnp.log(x), -100.0)
        log_1mx = jnp.maximum(jnp.log(1.0 - x), -100.0)
        bce = -(y * log_x + (1.0 - y) * log_1mx)          # elementwise: VPU + EUP

        if ragged:
            # The last grid block's DMA reads past the end of the array; those VMEM
            # rows hold garbage (possibly NaN after the logs) and must be zeroed
            # before folding into the partial sum.
            row_ids = lax.broadcasted_iota(jnp.int32, (tile_rows, LANES), 0)
            limit = jnp.where(pl.program_id(0) == pl.num_programs(0) - 1,
                              valid_last_rows, tile_rows)
            bce = jnp.where(row_ids < limit, bce, 0.0)

        # Fold the block into a lane-dense (8,128) partial: vreg-wise VPU adds only
        # (no cross-lane XLU reduce), then ONE weight multiply per block (hoisted).
        partial = jnp.sum(bce.reshape(tile_rows // SUBLANES, SUBLANES, LANES), axis=0)
        out_ref[...] = partial * w_ref[...]

    return kernel


def weighted_bce_loss(logits: jax.Array, labels: jax.Array, weights: jax.Array) -> jax.Array:
    """logits, labels: (B, K) probabilities / targets (any float dtype; labels may be
    bf16/int {0,1}); weights: (K,) float32.  Returns scalar f32 == mean(bce * weights)."""
    B, K = logits.shape
    assert labels.shape == (B, K)
    assert LANES % K == 0, "lane-dense layout assumes K divides 128"
    n = B * K
    reps = LANES // K

    padded_rows = pl.cdiv(n, LANES)              # rows of 128 lanes

    # Tiny batches: pallas_call launch + single-step pipeline overhead dwarfs the work.
    if padded_rows < FASTPATH_ROWS:
        return _reference_loss(logits, labels, weights)

    pad = padded_rows * LANES - n                # <= 127 elements: negligible concat

    def to_lane_dense(a: jax.Array) -> jax.Array:
        a_flat = a.reshape(-1)
        if pad:
            # pad with 1 (both x and y): bce is exactly 0 there thanks to the -100
            # clamp, so the pad needs no masking and the divisor stays the true B*K.
            a_flat = jnp.concatenate(
                [a_flat, jnp.full((pad,), 1, dtype=a_flat.dtype)])
        return a_flat.reshape(padded_rows, LANES)

    x2 = to_lane_dense(logits)                   # dtype passthrough (bf16 stays bf16)
    y2 = to_lane_dense(labels)

    # Per-lane weight = weights[lane % K], with the 1/(B*K) of the mean pre-folded.
    w_tile = (jnp.tile(weights.astype(jnp.float32), reps)
              / jnp.float32(n)).reshape(1, LANES)

    # Big blocks (low per-step overhead) but at least ~MIN_GRID_BLOCKS grid steps so
    # the "parallel" axis can shard across both v7x TensorCores.
    tile_rows = min(MAX_TILE_ROWS,
                    _round_up(pl.cdiv(padded_rows, MIN_GRID_BLOCKS), ROW_ALIGN))
    num_blocks = pl.cdiv(padded_rows, tile_rows)
    valid_last_rows = padded_rows - (num_blocks - 1) * tile_rows
    ragged = valid_last_rows != tile_rows        # static: mask code only emitted if needed

    kernel = _make_kernel(tile_rows, valid_last_rows, ragged)

    bytes_accessed = (x2.size * x2.dtype.itemsize + y2.size * y2.dtype.itemsize
                      + LANES * 4 + num_blocks * SUBLANES * LANES * 4)
    cost = pl.CostEstimate(flops=9 * n, transcendentals=2 * n,
                           bytes_accessed=bytes_accessed)

    partial = pl.pallas_call(
        kernel,
        out_shape=jax.ShapeDtypeStruct((num_blocks * SUBLANES, LANES), jnp.float32),
        grid=(num_blocks,),
        in_specs=[
            pl.BlockSpec((tile_rows, LANES), lambda i: (i, 0)),   # probabilities block
            pl.BlockSpec((tile_rows, LANES), lambda i: (i, 0)),   # labels block
            pl.BlockSpec((1, LANES), lambda i: (0, 0)),           # weight tile (resident)
        ],
        out_specs=pl.BlockSpec((SUBLANES, LANES), lambda i: (i, 0)),
        compiler_params=pltpu.CompilerParams(
            dimension_semantics=("parallel",),        # per-block partials: both TCs stream
            vmem_limit_bytes=64 * 1024 * 1024),       # headroom for 4096-row f32 blocks
        cost_estimate=cost,
    )(x2, y2, w_tile)

    # Tiny final reduction (num_blocks * 8 * 128 floats) done in XLA; padded/masked
    # contributions are exactly zero, so this equals mean(bce * weights).
    return jnp.sum(partial)


def make_weights(y_train: np.ndarray | None) -> jnp.ndarray:
    """Deterministic re-implementation of WeightedBCELoss.__init__ weight buffer."""
    if y_train is None:
        weights = np.ones(NUM_CLASSES - 1, dtype=np.float32)
    else:
        thresholds = np.arange(0, NUM_CLASSES - 1)
        n_t = np.array([np.sum(y_train == t) for t in thresholds], dtype=np.float64)
        sqrt_n = np.sqrt(n_t)
        weights = (sqrt_n / np.sum(sqrt_n)).astype(np.float32)
    return jnp.asarray(weights, dtype=jnp.float32)


if __name__ == "__main__":
    key = jax.random.PRNGKey(0)
    k_ytr, k1, k2, k3, k4 = jax.random.split(key, 5)

    # Deterministic synthetic "training labels" used only to build the weight buffer.
    y_train = np.asarray(
        jax.random.randint(k_ytr, (256,), 0, NUM_CLASSES, dtype=jnp.int32))
    weights = make_weights(y_train)               # (K,) = (8,)
    K = NUM_CLASSES - 1

    # --- 1) kernel path, evenly divided grid: 2048*8 = 16384 elems -> 4 blocks of 32 rows
    B1 = 2048
    logits1 = jax.random.uniform(k1, (B1, K), jnp.float32, minval=1e-4, maxval=1.0 - 1e-4)
    labels1 = (jax.random.uniform(k2, (B1, K), jnp.float32) > 0.5).astype(jnp.float32)
    loss1 = weighted_bce_loss(logits1, labels1, weights)
    jax.block_until_ready(loss1)
    ref1 = _reference_loss(logits1, labels1, weights)
    assert jnp.allclose(loss1, ref1, rtol=1e-4, atol=1e-6), (loss1, ref1)

    # --- 2) kernel path, ragged tail (masked last block) + soft labels, f32
    B2 = 2333                                      # 146 rows -> 3 blocks of 64, last has 18 valid
    logits2 = jax.random.uniform(k3, (B2, K), jnp.float32, minval=1e-3, maxval=1.0 - 1e-3)
    labels2 = jax.random.uniform(k4, (B2, K), jnp.float32)   # soft targets in [0,1]
    loss2 = weighted_bce_loss(logits2, labels2, weights)
    jax.block_until_ready(loss2)
    ref2 = _reference_loss(logits2, labels2, weights)
    assert jnp.allclose(loss2, ref2, rtol=1e-4, atol=1e-6), (loss2, ref2)

    # --- 3) kernel path with bf16 passthrough (half the HBM traffic), even grid
    B3 = 4096
    logits3 = jax.random.uniform(k1, (B3, K), jnp.float32,
                                 minval=0.05, maxval=0.95).astype(jnp.bfloat16)
    labels3 = (jax.random.uniform(k2, (B3, K), jnp.float32) > 0.5).astype(jnp.bfloat16)
    loss3 = weighted_bce_loss(logits3, labels3, weights)
    jax.block_until_ready(loss3)
    ref3 = _reference_loss(logits3, labels3, weights)
    assert jnp.allclose(loss3, ref3, rtol=1e-4, atol=1e-6), (loss3, ref3)

    # --- 4) tiny-batch fast path (plain XLA, no pallas launch)
    B4 = 16
    logits4 = jax.random.uniform(k3, (B4, K), jnp.float32, minval=1e-4, maxval=1.0 - 1e-4)
    labels4 = (jax.random.uniform(k4, (B4, K), jnp.float32) > 0.5).astype(jnp.float32)
    loss4 = weighted_bce_loss(logits4, labels4, weights)
    jax.block_until_ready(loss4)
    ref4 = _reference_loss(logits4, labels4, weights)
    assert jnp.allclose(loss4, ref4, rtol=1e-5, atol=1e-7), (loss4, ref4)

    print("KERNEL_OK")
</pallas_src>

<mosaic_0001>
module attributes {stable_mosaic.version = 11 : i64} {
  func.func @kernel(%arg0: i32, %arg1: memref<32x128xf32, #tpu.memory_space<vmem>>, %arg2: memref<32x128xf32, #tpu.memory_space<vmem>>, %arg3: memref<1x128xf32, #tpu.memory_space<vmem>>, %arg4: memref<8x128xf32, #tpu.memory_space<vmem>>) attributes {dimension_semantics = [#tpu.dimension_semantics<parallel>], iteration_bounds = array<i64: 4>, scalar_prefetch = 0 : i64, scratch_operands = 0 : i64, tpu.core_type = #tpu.core_type<tc>, window_params = [{transform_indices = @transform_0, window_bounds = array<i64: 32, 128>}, {transform_indices = @transform_1, window_bounds = array<i64: 32, 128>}, {pipeline_mode = #tpu.pipeline_mode<synchronous>, transform_indices = @transform_2, window_bounds = array<i64: 1, 128>}, {transform_indices = @transform_3, window_bounds = array<i64: 8, 128>}]} {
    %c0 = arith.constant 0 : index
    %c0_0 = arith.constant 0 : index
    %0 = vector.load %arg1[%c0, %c0_0] : memref<32x128xf32, #tpu.memory_space<vmem>>, vector<32x128xf32>
    %c0_1 = arith.constant 0 : index
    %c0_2 = arith.constant 0 : index
    %1 = vector.load %arg2[%c0_1, %c0_2] : memref<32x128xf32, #tpu.memory_space<vmem>>, vector<32x128xf32>
    %2 = math.log %0 : vector<32x128xf32>
    %cst = arith.constant -1.000000e+02 : f32
    %3 = vector.broadcast %cst : f32 to vector<32x128xf32>
    %4 = arith.maximumf %2, %3 : vector<32x128xf32>
    %cst_3 = arith.constant 1.000000e+00 : f32
    %5 = vector.broadcast %cst_3 : f32 to vector<32x128xf32>
    %6 = arith.subf %5, %0 : vector<32x128xf32>
    %7 = math.log %6 : vector<32x128xf32>
    %cst_4 = arith.constant -1.000000e+02 : f32
    %8 = vector.broadcast %cst_4 : f32 to vector<32x128xf32>
    %9 = arith.maximumf %7, %8 : vector<32x128xf32>
    %10 = arith.mulf %1, %4 : vector<32x128xf32>
    %cst_5 = arith.constant 1.000000e+00 : f32
    %11 = vector.broadcast %cst_5 : f32 to vector<32x128xf32>
    %12 = arith.subf %11, %1 : vector<32x128xf32>
    %13 = arith.mulf %12, %9 : vector<32x128xf32>
    %14 = arith.addf %10, %13 : vector<32x128xf32>
    %cst_6 = arith.constant 0.000000e+00 : f32
    %15 = vector.broadcast %cst_6 : f32 to vector<32x128xf32>
    %16 = arith.subf %15, %14 : vector<32x128xf32>
    %17 = vector.shape_cast %16 : vector<32x128xf32> to vector<4x8x128xf32>
    %cst_7 = arith.constant dense<0.000000e+00> : vector<8x128xf32>
    %18 = vector.multi_reduction <add>, %17, %cst_7 [0] : vector<4x8x128xf32> to vector<8x128xf32>
    %c0_8 = arith.constant 0 : index
    %c0_9 = arith.constant 0 : index
    %19 = vector.load %arg3[%c0_8, %c0_9] : memref<1x128xf32, #tpu.memory_space<vmem>>, vector<1x128xf32>
    %20 = vector.broadcast %19 : vector<1x128xf32> to vector<8x128xf32>
    %21 = arith.mulf %18, %20 : vector<8x128xf32>
    %c0_10 = arith.constant 0 : index
    %c0_11 = arith.constant 0 : index
    %22 = vector.load %arg4[%c0_10, %c0_11] : memref<8x128xf32, #tpu.memory_space<vmem>>, vector<8x128xf32>
    tpu.vector_store %arg4[%c0_10, %c0_11], %21 {strides = array<i32>} : memref<8x128xf32, #tpu.memory_space<vmem>>, vector<8x128xf32>,
    return
  }
  func.func @transform_0(%arg0: i32) -> (i32, i32) {
    %c0_i32 = arith.constant 0 : i32
    %c0_i32_0 = arith.constant 0 : i32
    return %arg0, %c0_i32 : i32, i32
  }
  func.func @transform_1(%arg0: i32) -> (i32, i32) {
    %c0_i32 = arith.constant 0 : i32
    %c0_i32_0 = arith.constant 0 : i32
    return %arg0, %c0_i32 : i32, i32
  }
  func.func @transform_2(%arg0: i32) -> (i32, i32) {
    %c0_i32 = arith.constant 0 : i32
    %c0_i32_0 = arith.constant 0 : i32
    %c0_i32_1 = arith.constant 0 : i32
    return %c0_i32, %c0_i32_0 : i32, i32
  }
  func.func @transform_3(%arg0: i32) -> (i32, i32) {
    %c0_i32 = arith.constant 0 : i32
    %c0_i32_0 = arith.constant 0 : i32
    return %arg0, %c0_i32 : i32, i32
  }
}

</mosaic_0001>

<llo_original>
// kernel: tpu_custom_call.1
$region0: #{tpu_custom_call.1}
  #allocation0 [shape = 'u32[]', space=smem, size = 0x4, offset = 0x4, fixed_abs, tag = 'smem constant byte address 0x4 - core index']
  #allocation1 [shape = 'u32[144,128]{1,0:T(1,128)}', space=vmem, size = 0x12000, scoped, tag = 'internal scratch']
  %s0 = inlined_call_operand.hbm [shape: f32[128,128], index: 0, kind: input, shape index: {}]
  %s1 = inlined_call_operand.hbm [shape: f32[128,128], index: 1, kind: input, shape index: {}]
  %s2 = inlined_call_operand.hbm [shape: f32[1,128], index: 2, kind: input, shape index: {}]
  %s3 = inlined_call_operand.hbm [shape: f32[32,128], index: 3, kind: output, shape index: {}]
  %s4 = sld [smem:[#allocation0]]
  $region57: #{tpu_custom_call.1} parent=0
    _
  %s6 = ssub.s32 1, %s4
  %s7 = scalar_select 0, %s6, %s4
  $region1: #{tpu_custom_call.1} parent=0
    #allocation2 [shape = 'u8[32768]{0}', space=vmem, size = 0x8000, scoped, tag = 'input window, operand 0']
    #allocation3 [shape = 's32[2]{0}', space=sflag, size = 0x8, scoped, tag = 'scoped memory for tpu_custom_call.1']
    #allocation4 [shape = 's32[2]{0}', space=sflag, size = 0x8, scoped, tag = 'scoped memory for tpu_custom_call.1']
    #allocation5 [shape = 'u8[32768]{0}', space=vmem, size = 0x8000, scoped, tag = 'input window, operand 1']
    #allocation6 [shape = 's32[2]{0}', space=sflag, size = 0x8, scoped, tag = 'scoped memory for tpu_custom_call.1']
    #allocation7 [shape = 'u8[512]{0}', space=vmem, size = 0x400, scoped, tag = 'input window, operand 2, single buffered']
    #allocation8 [shape = 'u8[8192]{0}', space=vmem, size = 0x2000, scoped, tag = 'output window, operand 0']
    %8 = vsyncpa [#allocation3], 0
    %s9 = scalar_lea.sflag [#allocation3], 1
    %10 = vsyncpa %s9, 0
    %11 = vsyncpa [#allocation6], 0
    %s12 = scalar_lea.sflag [#allocation6], 1
    %13 = vsyncpa %s12, 0
    %14 = vsyncpa [#allocation4], 0
    %s15 = scalar_lea.sflag [#allocation4], 1
    %16 = vsyncpa %s15, 0
    loop: start=0, step=1, limit=6
    $region2: #{tpu_custom_call.1} parent=1 // loop_pre_header
      _
    $region3: #{tpu_custom_call.1} parent=1 // loop_header
      %s18 = sphi 0, %s22
      %p19 = scmp.ge.s32.totalorder %s18, 6
      %s28 = sphi 0, %s30
      %s31 = sphi 0, %s28
      %s32 = sphi 0, %s31
      %s48 = sphi 0, %s32
      %s54 = sphi 0, %s56
      %s57 = sphi 0, %s54
      %s58 = sphi 0, %s57
      %s74 = sphi 0, %s58
      %s78 = sphi 0, %s78
      %s80 = sphi 0, %s78
      %s81 = sphi 0, %s80
      %s95 = sphi 0, %s81
      %s101 = sphi 0, %s103
      %s104 = sphi 0, %s101
      %s105 = sphi 0, %s104
      %s121 = sphi 0, %s105
    $region4: #{tpu_custom_call.1} parent=1 // loop_header_branch
      %21 = sbr.rel (%p19) target = $region8
    $region5: #{tpu_custom_call.1} parent=1 // loop_body
      %s23 = ssub.s32 %s18, 1
      %s24 = ssub.s32 %s18, 2
      %s25 = sadd.s32 %s18, 1
      %s26 = ssub.s32 %s18, %s25
      %p27 = scmp.eq.s32.totalorder %s26, 0
      %s29 = sadd.s32 %s28, 1
      %s30 = scalar_select %p27, %s28, %s29
      %p33 = pneg %p27
      %p34 = scmp.eq.s32.totalorder %s18, 3
      %p35 = por %p33, %p34
      %p36 = scmp.ne.s32.totalorder %s28, %s31
      %p37 = scmp.eq.s32.totalorder %s18, 0
      %p38 = por %p36, %p37
      %p39 = scmp.ne.s32.totalorder %s28, %s31
      %p40 = scmp.eq.s32.totalorder %s23, 3
      %p41 = por %p39, %p40
      %p42 = scmp.ne.s32.totalorder %s31, %s32
      %p43 = scmp.eq.s32.totalorder %s23, 0
      %p44 = por %p42, %p43
      %p45 = scmp.ne.s32.totalorder %s31, %s32
      %p46 = scmp.eq.s32.totalorder %s24, 3
      %p47 = por %p45, %p46
      %p49 = scmp.ne.s32.totalorder %s32, %s48
      %p50 = scmp.eq.s32.totalorder %s24, 0
      %p51 = por %p49, %p50
      %s52 = ssub.s32 %s18, %s25
      %p53 = scmp.eq.s32.totalorder %s52, 0
      %s55 = sadd.s32 %s54, 1
      %s56 = scalar_select %p53, %s54, %s55
      %p59 = pneg %p53
      %p60 = scmp.eq.s32.totalorder %s18, 3
      %p61 = por %p59, %p60
      %p62 = scmp.ne.s32.totalorder %s54, %s57
      %p63 = scmp.eq.s32.totalorder %s18, 0
      %p64 = por %p62, %p63
      %p65 = scmp.ne.s32.totalorder %s54, %s57
      %p66 = scmp.eq.s32.totalorder %s23, 3
      %p67 = por %p65, %p66
      %p68 = scmp.ne.s32.totalorder %s57, %s58
      %p69 = scmp.eq.s32.totalorder %s23, 0
      %p70 = por %p68, %p69
      %p71 = scmp.ne.s32.totalorder %s57, %s58
      %p72 = scmp.eq.s32.totalorder %s24, 3
      %p73 = por %p71, %p72
      %p75 = scmp.ne.s32.totalorder %s58, %s74
      %p76 = scmp.eq.s32.totalorder %s24, 0
      %p77 = por %p75, %p76
      %s79 = sadd.s32 %s78, 1
      %p82 = scmp.eq.s32.totalorder %s18, 3
      %p83 = scmp.ne.s32.totalorder %s78, %s80
      %p84 = scmp.eq.s32.totalorder %s18, 0
      %p85 = por %p83, %p84
      %p86 = scmp.ne.s32.totalorder %s78, %s80
      %p87 = scmp.eq.s32.totalorder %s23, 3
      %p88 = por %p86, %p87
      %p89 = scmp.ne.s32.totalorder %s80, %s81
      %p90 = scmp.eq.s32.totalorder %s23, 0
      %p91 = por %p89, %p90
      %p92 = scmp.ne.s32.totalorder %s80, %s81
      %p93 = scmp.eq.s32.totalorder %s24, 3
      %p94 = por %p92, %p93
      %p96 = scmp.ne.s32.totalorder %s81, %s95
      %p97 = scmp.eq.s32.totalorder %s24, 0
      %p98 = por %p96, %p97
      %s99 = ssub.s32 %s18, %s25
      %p100 = scmp.eq.s32.totalorder %s99, 0
      %s102 = sadd.s32 %s101, 1
      %s103 = scalar_select %p100, %s101, %s102
      %p106 = pneg %p100
      %p107 = scmp.eq.s32.totalorder %s18, 3
      %p108 = por %p106, %p107
      %p109 = scmp.ne.s32.totalorder %s101, %s104
      %p110 = scmp.eq.s32.totalorder %s18, 0
      %p111 = por %p109, %p110
      %p112 = scmp.ne.s32.totalorder %s101, %s104
      %p113 = scmp.eq.s32.totalorder %s23, 3
      %p114 = por %p112, %p113
      %p115 = scmp.ne.s32.totalorder %s104, %s105
      %p116 = scmp.eq.s32.totalorder %s23, 0
      %p117 = por %p115, %p116
      %p118 = scmp.ne.s32.totalorder %s104, %s105
      %p119 = scmp.eq.s32.totalorder %s24, 3
      %p120 = por %p118, %p119
      %p122 = scmp.ne.s32.totalorder %s105, %s121
      %p123 = scmp.eq.s32.totalorder %s24, 0
      %p124 = por %p122, %p123
      %p125 = scmp.le.s32.totalorder 1, %s18
      %p126 = scmp.lt.s32.totalorder %s18, 5
      %p127 = pnand %p125, %p126
      %p128 = pneg %p127
      // Predicated region
      $region9: #{tpu_custom_call.1} parent=5 // pred_check
        _
      $region10: #{tpu_custom_call.1} parent=5 // pred_check_branch
        %130 = sbr.rel (%p127) target = $region12
      $region11: #{tpu_custom_call.1} parent=5 // pred_region
        %s131 = ssub.s32 %s18, 1
        // Predicated region
        $region13: #{tpu_custom_call.1} parent=11 // pred_check
          %p132 = pneg %p91
        $region14: #{tpu_custom_call.1} parent=11 // pred_check_branch
          %134 = sbr.rel (%p132) target = $region16
        $region15: #{tpu_custom_call.1} parent=11 // pred_region
          %s136 = ssub.s32 16, 16
          %137 = vsyncadd [#allocation6], %s136
          %s139 = sshll.u32 [#allocation7], 4
          %s140 = int_to_ptr.vmem [resolvable:$true] %s139
          %142 = dma.hbm_to_vmem [thread:$0]  %s2, 16, %s140, [#allocation6]
        $region16: #{tpu_custom_call.1} parent=11 // pred_fallthru
          _
      $region12: #{tpu_custom_call.1} parent=5 // pred_fallthru
        _
      %p143 = scmp.lt.s32.totalorder %s18, 4
      // Predicated region
      $region17: #{tpu_custom_call.1} parent=5 // pred_check
        %p144 = pneg %p143
      $region18: #{tpu_custom_call.1} parent=5 // pred_check_branch
        %146 = sbr.rel (%p144) target = $region20
      $region19: #{tpu_custom_call.1} parent=5 // pred_region
        // Predicated region
        $region21: #{tpu_custom_call.1} parent=19 // pred_check
          %p147 = pneg %p38
        $region22: #{tpu_custom_call.1} parent=19 // pred_check_branch
          %149 = sbr.rel (%p147) target = $region24
        $region23: #{tpu_custom_call.1} parent=19 // pred_region
          %s150 = sand.u32 %s28, 1
          %s151 = scalar_lea.sflag [#allocation3], %s150
          %s152 = sand.u32 %s28, 1
          %s153 = smul.addr %s152, 32
          %s154 = scalar_lea.vmem [#allocation2], %s153
          %s155 = smul.u32 4, %s18
          %s157 = ssub.s32 512, 512
          %158 = vsyncadd %s151, %s157
          %s159 = smul.addr %s155, 128
          %s160 = scalar_lea.hbm %s0, %s159
          %s161 = sshll.u32 %s154, 4
          %s162 = int_to_ptr.vmem [resolvable:$true] %s161
          %167 = dma.hbm_to_vmem [thread:$0]  %s160, 512, %s162, %s151, 128, 128, 8
        $region24: #{tpu_custom_call.1} parent=19 // pred_fallthru
          _
        // Predicated region
        $region25: #{tpu_custom_call.1} parent=19 // pred_check
          %p168 = pneg %p64
        $region26: #{tpu_custom_call.1} parent=19 // pred_check_branch
          %170 = sbr.rel (%p168) target = $region28
        $region27: #{tpu_custom_call.1} parent=19 // pred_region
          %s171 = sand.u32 %s18, 1
          %s172 = scalar_lea.sflag [#allocation6], %s171
          %s173 = sand.u32 %s54, 1
          %s174 = smul.addr %s173, 32
          %s175 = scalar_lea.vmem [#allocation5], %s174
          %s176 = smul.u32 4, %s18
          %s178 = ssub.s32 512, 512
          %179 = vsyncadd %s172, %s178
          %s180 = smul.addr %s176, 128
          %s181 = scalar_lea.hbm %s1, %s180
          %s182 = sshll.u32 %s175, 4
          %s183 = int_to_ptr.vmem [resolvable:$true] %s182
          %188 = dma.hbm_to_vmem [thread:$0]  %s181, 512, %s183, %s172, 128, 128, 8
        $region28: #{tpu_custom_call.1} parent=19 // pred_fallthru
          _
      $region20: #{tpu_custom_call.1} parent=5 // pred_fallthru
        _
      %p189 = scmp.le.s32.totalorder 1, %s18
      %p190 = scmp.lt.s32.totalorder %s18, 5
      %p191 = pnand %p189, %p190
      %p192 = pneg %p191
      // Predicated region
      $region29: #{tpu_custom_call.1} parent=5 // pred_check
        _
      $region30: #{tpu_custom_call.1} parent=5 // pred_check_branch
        %194 = sbr.rel (%p191) target = $region32
      $region31: #{tpu_custom_call.1} parent=5 // pred_region
        %s195 = ssub.s32 %s18, 1
        %s196 = sand.u32 %s31, 1
        %s197 = scalar_lea.sflag [#allocation3], %s196
        %s198 = sand.u32 %s31, 1
        %s199 = smul.addr %s198, 32
        %s200 = scalar_lea.vmem [#allocation2], %s199
        // Predicated region
        $region33: #{tpu_custom_call.1} parent=31 // pred_check
          %p201 = pneg %p44
        $region34: #{tpu_custom_call.1} parent=31 // pred_check_branch
          %203 = sbr.rel (%p201) target = $region36
        $region35: #{tpu_custom_call.1} parent=31 // pred_region
          %204 = dma.done %s197, 512
        $region36: #{tpu_custom_call.1} parent=31 // pred_fallthru
          _
        %s205 = sand.u32 %s23, 1
        %s206 = scalar_lea.sflag [#allocation6], %s205
        %s207 = sand.u32 %s57, 1
        %s208 = smul.addr %s207, 32
        %s209 = scalar_lea.vmem [#allocation5], %s208
        // Predicated region
        $region37: #{tpu_custom_call.1} parent=31 // pred_check
          %p210 = pneg %p70
        $region38: #{tpu_custom_call.1} parent=31 // pred_check_branch
          %212 = sbr.rel (%p210) target = $region40
        $region39: #{tpu_custom_call.1} parent=31 // pred_region
          %213 = dma.done %s206, 512
        $region40: #{tpu_custom_call.1} parent=31 // pred_fallthru
          _
        // Predicated region
        $region41: #{tpu_custom_call.1} parent=31 // pred_check
          %p214 = pneg %p91
        $region42: #{tpu_custom_call.1} parent=31 // pred_check_branch
          %216 = sbr.rel (%p214) target = $region44
        $region43: #{tpu_custom_call.1} parent=31 // pred_region
          %217 = dma.done [#allocation6], 16
        $region44: #{tpu_custom_call.1} parent=31 // pred_fallthru
          _
        %s218 = sand.u32 %s31, 1
        %s219 = scalar_lea.sflag [#allocation3], %s218
        %s220 = sand.u32 %s31, 1
        %s221 = smul.addr %s220, 32
        %s222 = scalar_lea.vmem [#allocation2], %s221
        %p223 = pneg %p44
        %p224 = pneg %p41
        %s225 = sand.u32 %s23, 1
        %s226 = scalar_lea.sflag [#allocation6], %s225
        %s227 = sand.u32 %s57, 1
        %s228 = smul.addr %s227, 32
        %s229 = scalar_lea.vmem [#allocation5], %s228
        %p230 = pneg %p70
        %p231 = pneg %p67
        %p232 = pneg %p91
        %p233 = pneg %p88
        %p234 = pneg %p117
        %p235 = pneg %p114
        %s236 = sand.u32 %s104, 1
        %s237 = scalar_lea.sflag [#allocation4], %s236
        %s238 = sand.u32 %s104, 1
        %s239 = smul.addr %s238, 8
        %s240 = scalar_lea.vmem [#allocation8], %s239
        %s241 = smul.u32 4, %s23
        %s242 = smul.u32 4, %s23
        %v243 = vld [vmem:[%s200] sm:$0xff]
        %v244 = vld [vmem:[%s200 + $0x8] sm:$0xff]
        %v245 = vld [vmem:[%s200 + $0x10] sm:$0xff]
        %v246 = vld [vmem:[%s200 + $0x18] sm:$0xff]
        %v247 = vld [vmem:[%s209] sm:$0xff]
        %v248 = vld [vmem:[%s209 + $0x8] sm:$0xff]
        %v249 = vld [vmem:[%s209 + $0x10] sm:$0xff]
        %v250 = vld [vmem:[%s209 + $0x18] sm:$0xff]
        %v251 = vlog2.pop %v243
        %v252 = vmul.f32 %v251, 0.6931472
        %v253 = vlog2.pop %v244
        %v254 = vmul.f32 %v253, 0.6931472
        %v255 = vlog2.pop %v245
        %v256 = vmul.f32 %v255, 0.6931472
        %v257 = vlog2.pop %v246
        %v258 = vmul.f32 %v257, 0.6931472
        %v259 = vmax.f32 %v252, -100.0
        %v260 = vmax.f32 %v254, -100.0
        %v261 = vmax.f32 %v256, -100.0
        %v262 = vmax.f32 %v258, -100.0
        %v263 = vsub.f32 1.0, %v243
        %v264 = vsub.f32 1.0, %v244
        %v265 = vsub.f32 1.0, %v245
        %v266 = vsub.f32 1.0, %v246
        %v267 = vlog2.pop %v263
        %v268 = vmul.f32 %v267, 0.6931472
        %v269 = vlog2.pop %v264
        %v270 = vmul.f32 %v269, 0.6931472
        %v271 = vlog2.pop %v265
        %v272 = vmul.f32 %v271, 0.6931472
        %v273 = vlog2.pop %v266
        %v274 = vmul.f32 %v273, 0.6931472
        %v275 = vmax.f32 %v268, -100.0
        %v276 = vmax.f32 %v270, -100.0
        %v277 = vmax.f32 %v272, -100.0
        %v278 = vmax.f32 %v274, -100.0
        %v279 = vmul.f32 %v247, %v259
        %v280 = vmul.f32 %v248, %v260
        %v281 = vmul.f32 %v249, %v261
        %v282 = vmul.f32 %v250, %v262
        %v283 = vsub.f32 1.0, %v247
        %v284 = vsub.f32 1.0, %v248
        %v285 = vsub.f32 1.0, %v249
        %v286 = vsub.f32 1.0, %v250
        %v287 = vmul.f32 %v283, %v275
        %v288 = vmul.f32 %v284, %v276
        %v289 = vmul.f32 %v285, %v277
        %v290 = vmul.f32 %v286, %v278
        %v291 = vadd.f32 %v279, %v287
        %v292 = vadd.f32 %v280, %v288
        %v293 = vadd.f32 %v281, %v289
        %v294 = vadd.f32 %v282, %v290
        %v295 = vsub.f32 0.0, %v291
        %v296 = vsub.f32 0.0, %v292
        %v297 = vsub.f32 0.0, %v293
        %v298 = vsub.f32 0.0, %v294
        %v299 = vadd.f32 %v295, %v296
        %v300 = vadd.f32 %v299, %v297
        %v301 = vadd.f32 %v300, %v298
        %v302 = vld [vmem:[#allocation7] sm:$0x1]
        %v304 = vlaneseq
        %v305 = vshrl.u32 %v304, 7
        %v306 = vsub.s32 0, %v305
        %v307 = vrot.slane %v302, %v306
        %v309 = vmul.f32 %v301, %v307
        %310 = vst [vmem:[%s240] sm:$0xff] %v309
        %s311 = sand.u32 %s104, 1
        %s312 = scalar_lea.sflag [#allocation4], %s311
        %s313 = sand.u32 %s104, 1
        %s314 = smul.addr %s313, 8
        %s315 = scalar_lea.vmem [#allocation8], %s314
        // Predicated region
        $region45: #{tpu_custom_call.1} parent=31 // pred_check
          %p316 = pneg %p114
        $region46: #{tpu_custom_call.1} parent=31 // pred_check_branch
          %318 = sbr.rel (%p316) target = $region48
        $region47: #{tpu_custom_call.1} parent=31 // pred_region
          %s320 = ssub.s32 128, 128
          %321 = vsyncadd %s312, %s320
          %s322 = smul.addr %s23, 128
          %s323 = scalar_lea.hbm %s3, %s322
          %s325 = sshll.u32 %s315, 4
          %s326 = int_to_ptr.vmem [resolvable:$true] %s325
          %328 = dma.vmem_to_hbm [thread:$0]  %s326, 128, %s323, %s312
        $region48: #{tpu_custom_call.1} parent=31 // pred_fallthru
          _
      $region32: #{tpu_custom_call.1} parent=5 // pred_fallthru
        _
      %p329 = scmp.le.s32.totalorder 2, %s18
      // Predicated region
      $region49: #{tpu_custom_call.1} parent=5 // pred_check
        %p330 = pneg %p329
      $region50: #{tpu_custom_call.1} parent=5 // pred_check_branch
        %332 = sbr.rel (%p330) target = $region52
      $region51: #{tpu_custom_call.1} parent=5 // pred_region
        %s333 = ssub.s32 %s18, 2
        // Predicated region
        $region53: #{tpu_custom_call.1} parent=51 // pred_check
          %p334 = pneg %p120
        $region54: #{tpu_custom_call.1} parent=51 // pred_check_branch
          %336 = sbr.rel (%p334) target = $region56
        $region55: #{tpu_custom_call.1} parent=51 // pred_region
          %s337 = sand.u32 %s105, 1
          %s338 = scalar_lea.sflag [#allocation4], %s337
          %s339 = sand.u32 %s105, 1
          %s340 = smul.addr %s339, 8
          %s341 = scalar_lea.vmem [#allocation8], %s340
          %342 = dma.done %s338, 128
        $region56: #{tpu_custom_call.1} parent=51 // pred_fallthru
          _
      $region52: #{tpu_custom_call.1} parent=5 // pred_fallthru
        _
    $region6: #{tpu_custom_call.1} parent=1 // loop_footer
      %s22 = sadd.s32 1, %s18
    $region7: #{tpu_custom_call.1} parent=1 // loop_footer_branch
      %17 = sbr.rel target = $region3
    $region8: #{tpu_custom_call.1} parent=1 // loop_exit
      _
    %343 = vsyncpa [#allocation3], 1
    %s344 = scalar_lea.sflag [#allocation3], 1
    %345 = vsyncpa %s344, 1
    %346 = vsyncpa [#allocation6], 1
    %s347 = scalar_lea.sflag [#allocation6], 1
    %348 = vsyncpa %s347, 1
    %349 = vsyncpa [#allocation4], 1
    %s350 = scalar_lea.sflag [#allocation4], 1
    %351 = vsyncpa %s350, 1

</llo_original>
